<compile_context>
chip_gen: v6e
topology: v6e:2x2x1
jax: 0.10.0
libtpu: 0.0.40
codegen_flags: <defaults>
</compile_context>

<pallas_src>
import functools

import jax
import jax.numpy as jnp
from jax.experimental import pallas as pl
from jax.experimental.pallas import tpu as pltpu


def _embed_kernel(emb_ref, wproj_ref, w1_ref, w2_ref, b_ref, out_ref):
    """Fused: proj (no bias) -> highway layer 1 -> highway layer 2.

    w1/w2 are packed per-layer weights [Hp, 2*Hp] = [transform | gate];
    b is [2, 2*Hp] with row l = layer-l packed bias [b_t | b_g].
    Matmuls run in the storage dtype of the weights (f32 or bf16) with f32
    accumulation; bias add, sigmoid/relu and gating stay in f32.
    """
    Hp = out_ref.shape[-1]

    x = emb_ref[...]
    # Projection: [tile_r, Dp] @ [Dp, Hp] -> f32 [tile_r, Hp]
    h = jnp.dot(x, wproj_ref[...], preferred_element_type=jnp.float32)

    b = b_ref[...].astype(jnp.float32)          # (2, 2*Hp), hoisted once

    # Highway layer 1: single fused matmul producing [transform | gate]
    tg = jnp.dot(h.astype(w1_ref.dtype), w1_ref[...],
                 preferred_element_type=jnp.float32) + b[0:1, :]
    t = jnp.maximum(tg[:, :Hp], 0.0)
    g = jax.nn.sigmoid(tg[:, Hp:])
    h = g * t + (1.0 - g) * h

    # Highway layer 2
    tg = jnp.dot(h.astype(w2_ref.dtype), w2_ref[...],
                 preferred_element_type=jnp.float32) + b[1:2, :]
    t = jnp.maximum(tg[:, :Hp], 0.0)
    g = jax.nn.sigmoid(tg[:, Hp:])
    h = g * t + (1.0 - g) * h

    out_ref[...] = h.astype(out_ref.dtype)


def _pad_to(n, mult):
    return ((n + mult - 1) // mult) * mult


@functools.partial(jax.jit, static_argnames=("tile_r", "compute_dtype"))
def embedding_forward(x, word_vectors, params, *, tile_r=512,
                      compute_dtype=jnp.float32):
    """x: [B, S] int32 token ids.  Returns [B, S, H] float32 (eval mode)."""
    B, S = x.shape
    V, D = word_vectors.shape
    H = params["w_proj"].shape[1]

    # Lane-dense padded widths (multiples of 128) so matmul outputs and stores
    # use full vregs / unmasked vst.
    Dp = _pad_to(D, 128)
    Hp = _pad_to(H, 128)

    cdt = compute_dtype

    # --- pack & pad parameters (all zero-padded lanes stay exactly zero) ---
    w_proj = jnp.zeros((Dp, Hp), cdt).at[:D, :H].set(params["w_proj"].astype(cdt))

    def pack_layer(wt, bt, wg, bg):
        w = jnp.zeros((Hp, 2 * Hp), cdt)
        w = w.at[:H, :H].set(wt.astype(cdt))
        w = w.at[:H, Hp:Hp + H].set(wg.astype(cdt))
        b = jnp.zeros((1, 2 * Hp), jnp.float32)
        b = b.at[:, :H].set(bt.astype(jnp.float32))
        b = b.at[:, Hp:Hp + H].set(bg.astype(jnp.float32))
        return w, b

    w1, b1 = pack_layer(params["w_t1"], params["b_t1"],
                        params["w_g1"], params["b_g1"])
    w2, b2 = pack_layer(params["w_t2"], params["b_t2"],
                        params["w_g2"], params["b_g2"])
    b_all = jnp.concatenate([b1, b2], axis=0)            # (2, 2*Hp)

    # --- glue: embedding lookup + flatten (gather; not the fused hot path) ---
    emb = jnp.take(word_vectors.astype(cdt), x.reshape(-1), axis=0)   # [R, D]
    # (dropout is identity in eval mode)

    R = B * S
    # Row tile: big (amortizes ~0.35us/step grid overhead, fills MXU rows),
    # capped at the (8-aligned) problem size for small inputs.
    tr = min(tile_r, _pad_to(R, 8))
    R_pad = _pad_to(R, tr)
    emb = jnp.pad(emb, ((0, R_pad - R), (0, Dp - D)))

    rows = lambda i: (i, 0)
    full = lambda i: (0, 0)   # resident across the whole grid

    out = pl.pallas_call(
        _embed_kernel,
        out_shape=jax.ShapeDtypeStruct((R_pad, Hp), jnp.float32),
        grid_spec=pltpu.PrefetchScalarGridSpec(
            num_scalar_prefetch=0,
            grid=(R_pad // tr,),
            in_specs=[
                pl.BlockSpec((tr, Dp), rows),        # emb tile
                pl.BlockSpec((Dp, Hp), full),        # proj weight
                pl.BlockSpec((Hp, 2 * Hp), full),    # hwy layer 1 [T|G] weight
                pl.BlockSpec((Hp, 2 * Hp), full),    # hwy layer 2 [T|G] weight
                pl.BlockSpec((2, 2 * Hp), full),     # packed biases
            ],
            out_specs=pl.BlockSpec((tr, Hp), rows),
        ),
        compiler_params=pltpu.CompilerParams(
            dimension_semantics=("parallel",)),
    )(emb, w_proj, w1, w2, b_all)

    return out[:R, :H].reshape(B, S, H)


def _reference(x, word_vectors, params):
    """Pure-JAX f32 reference of the PyTorch forward (eval mode)."""
    emb = jnp.take(word_vectors, x.reshape(-1), axis=0)
    h = emb @ params["w_proj"]
    for i in ("1", "2"):
        g = jax.nn.sigmoid(h @ params["w_g" + i] + params["b_g" + i])
        t = jax.nn.relu(h @ params["w_t" + i] + params["b_t" + i])
        h = g * t + (1.0 - g) * h
    B, S = x.shape
    return h.reshape(B, S, -1)


if __name__ == "__main__":
    key = jax.random.PRNGKey(0)
    V, D, H = 50, 64, 32          # vocab, word-vector dim, hidden size
    B, S = 2, 8                   # batch, sequence length
    drop_prob = 0.1               # unused in eval mode

    ks = jax.random.split(key, 12)
    word_vectors = jax.random.normal(ks[0], (V, D), dtype=jnp.float32)
    x = jax.random.randint(ks[1], (B, S), 0, V, dtype=jnp.int32)

    scale = 0.1
    params = {
        "w_proj": scale * jax.random.normal(ks[2], (D, H), jnp.float32),
        "w_t1":   scale * jax.random.normal(ks[3], (H, H), jnp.float32),
        "b_t1":   scale * jax.random.normal(ks[4], (1, H), jnp.float32),
        "w_g1":   scale * jax.random.normal(ks[5], (H, H), jnp.float32),
        "b_g1":   scale * jax.random.normal(ks[6], (1, H), jnp.float32),
        "w_t2":   scale * jax.random.normal(ks[7], (H, H), jnp.float32),
        "b_t2":   scale * jax.random.normal(ks[8], (1, H), jnp.float32),
        "w_g2":   scale * jax.random.normal(ks[9], (H, H), jnp.float32),
        "b_g2":   scale * jax.random.normal(ks[10], (1, H), jnp.float32),
    }

    ref = _reference(x, word_vectors, params)

    # f32 compute path (exactness check vs reference)
    out = embedding_forward(x, word_vectors, params,
                            compute_dtype=jnp.float32)
    out = jax.block_until_ready(out)
    assert out.shape == (B, S, H), out.shape
    assert jnp.allclose(out, ref, atol=1e-5, rtol=1e-5), "f32 mismatch vs reference"

    # bf16 matmul-input path (v6e/v7x MXU fast path), f32 accumulation
    out_bf16 = embedding_forward(x, word_vectors, params,
                                 compute_dtype=jnp.bfloat16)
    out_bf16 = jax.block_until_ready(out_bf16)
    assert out_bf16.shape == (B, S, H), out_bf16.shape
    assert jnp.allclose(out_bf16, ref, atol=3e-2, rtol=3e-2), "bf16 mismatch vs reference"

    print("KERNEL_OK")
</pallas_src>

<mosaic_0001>
module attributes {stable_mosaic.version = 11 : i64} {
  func.func @_embed_kernel(%arg0: i32, %arg1: memref<16x128xf32, #tpu.memory_space<vmem>>, %arg2: memref<128x128xf32, #tpu.memory_space<vmem>>, %arg3: memref<128x256xf32, #tpu.memory_space<vmem>>, %arg4: memref<128x256xf32, #tpu.memory_space<vmem>>, %arg5: memref<2x256xf32, #tpu.memory_space<vmem>>, %arg6: memref<16x128xf32, #tpu.memory_space<vmem>>) attributes {dimension_semantics = [#tpu.dimension_semantics<parallel>], iteration_bounds = array<i64: 1>, scalar_prefetch = 0 : i64, scratch_operands = 0 : i64, tpu.core_type = #tpu.core_type<tc>, window_params = [{transform_indices = @transform_0, window_bounds = array<i64: 16, 128>}, {pipeline_mode = #tpu.pipeline_mode<synchronous>, transform_indices = @transform_1, window_bounds = array<i64: 128, 128>}, {pipeline_mode = #tpu.pipeline_mode<synchronous>, transform_indices = @transform_2, window_bounds = array<i64: 128, 256>}, {pipeline_mode = #tpu.pipeline_mode<synchronous>, transform_indices = @transform_3, window_bounds = array<i64: 128, 256>}, {pipeline_mode = #tpu.pipeline_mode<synchronous>, transform_indices = @transform_4, window_bounds = array<i64: 2, 256>}, {transform_indices = @transform_5, window_bounds = array<i64: 16, 128>}]} {
    %c0 = arith.constant 0 : index
    %c0_0 = arith.constant 0 : index
    %0 = vector.load %arg1[%c0, %c0_0] : memref<16x128xf32, #tpu.memory_space<vmem>>, vector<16x128xf32>
    %c0_1 = arith.constant 0 : index
    %c0_2 = arith.constant 0 : index
    %1 = vector.load %arg2[%c0_1, %c0_2] : memref<128x128xf32, #tpu.memory_space<vmem>>, vector<128x128xf32>
    %cst = arith.constant dense<0.000000e+00> : vector<16x128xf32>
    %2 = tpu.matmul %0, %1, %cst {dimension_numbers = #tpu.dot_dimension_numbers<[1], [0], [0], [1], [0, 0, 1, 1], [], []>} : vector<16x128xf32>, vector<128x128xf32>, vector<16x128xf32> -> vector<16x128xf32>
    %c0_3 = arith.constant 0 : index
    %c0_4 = arith.constant 0 : index
    %3 = vector.load %arg5[%c0_3, %c0_4] : memref<2x256xf32, #tpu.memory_space<vmem>>, vector<2x256xf32>
    %c0_5 = arith.constant 0 : index
    %c0_6 = arith.constant 0 : index
    %4 = vector.load %arg3[%c0_5, %c0_6] : memref<128x256xf32, #tpu.memory_space<vmem>>, vector<128x256xf32>
    %cst_7 = arith.constant dense<0.000000e+00> : vector<16x256xf32>
    %5 = tpu.matmul %2, %4, %cst_7 {dimension_numbers = #tpu.dot_dimension_numbers<[1], [0], [0], [1], [0, 0, 1, 1], [], []>} : vector<16x128xf32>, vector<128x256xf32>, vector<16x256xf32> -> vector<16x256xf32>
    %6 = vector.extract_strided_slice %3 {offsets = [0, 0], sizes = [1, 256], strides = [1, 1]} : vector<2x256xf32> to vector<1x256xf32>
    %7 = vector.broadcast %6 : vector<1x256xf32> to vector<16x256xf32>
    %8 = arith.addf %5, %7 : vector<16x256xf32>
    %9 = vector.extract_strided_slice %8 {offsets = [0, 0], sizes = [16, 128], strides = [1, 1]} : vector<16x256xf32> to vector<16x128xf32>
    %cst_8 = arith.constant 0.000000e+00 : f32
    %10 = vector.broadcast %cst_8 : f32 to vector<16x128xf32>
    %11 = arith.maximumf %9, %10 : vector<16x128xf32>
    %12 = vector.extract_strided_slice %8 {offsets = [0, 128], sizes = [16, 128], strides = [1, 1]} : vector<16x256xf32> to vector<16x128xf32>
    %13 = arith.negf %12 : vector<16x128xf32>
    %14 = math.exp %13 : vector<16x128xf32>
    %cst_9 = arith.constant 1.000000e+00 : f32
    %15 = vector.broadcast %cst_9 : f32 to vector<16x128xf32>
    %16 = arith.addf %15, %14 : vector<16x128xf32>
    %17 = arith.divf %15, %16 : vector<16x128xf32>
    %18 = arith.mulf %17, %11 : vector<16x128xf32>
    %cst_10 = arith.constant 1.000000e+00 : f32
    %19 = vector.broadcast %cst_10 : f32 to vector<16x128xf32>
    %20 = arith.subf %19, %17 : vector<16x128xf32>
    %21 = arith.mulf %20, %2 : vector<16x128xf32>
    %22 = arith.addf %18, %21 : vector<16x128xf32>
    %c0_11 = arith.constant 0 : index
    %c0_12 = arith.constant 0 : index
    %23 = vector.load %arg4[%c0_11, %c0_12] : memref<128x256xf32, #tpu.memory_space<vmem>>, vector<128x256xf32>
    %cst_13 = arith.constant dense<0.000000e+00> : vector<16x256xf32>
    %24 = tpu.matmul %22, %23, %cst_13 {dimension_numbers = #tpu.dot_dimension_numbers<[1], [0], [0], [1], [0, 0, 1, 1], [], []>} : vector<16x128xf32>, vector<128x256xf32>, vector<16x256xf32> -> vector<16x256xf32>
    %25 = vector.extract_strided_slice %3 {offsets = [1, 0], sizes = [1, 256], strides = [1, 1]} : vector<2x256xf32> to vector<1x256xf32>
    %26 = vector.broadcast %25 : vector<1x256xf32> to vector<16x256xf32>
    %27 = arith.addf %24, %26 : vector<16x256xf32>
    %28 = vector.extract_strided_slice %27 {offsets = [0, 0], sizes = [16, 128], strides = [1, 1]} : vector<16x256xf32> to vector<16x128xf32>
    %cst_14 = arith.constant 0.000000e+00 : f32
    %29 = vector.broadcast %cst_14 : f32 to vector<16x128xf32>
    %30 = arith.maximumf %28, %29 : vector<16x128xf32>
    %31 = vector.extract_strided_slice %27 {offsets = [0, 128], sizes = [16, 128], strides = [1, 1]} : vector<16x256xf32> to vector<16x128xf32>
    %32 = arith.negf %31 : vector<16x128xf32>
    %33 = math.exp %32 : vector<16x128xf32>
    %cst_15 = arith.constant 1.000000e+00 : f32
    %34 = vector.broadcast %cst_15 : f32 to vector<16x128xf32>
    %35 = arith.addf %34, %33 : vector<16x128xf32>
    %36 = arith.divf %34, %35 : vector<16x128xf32>
    %37 = arith.mulf %36, %30 : vector<16x128xf32>
    %cst_16 = arith.constant 1.000000e+00 : f32
    %38 = vector.broadcast %cst_16 : f32 to vector<16x128xf32>
    %39 = arith.subf %38, %36 : vector<16x128xf32>
    %40 = arith.mulf %39, %22 : vector<16x128xf32>
    %41 = arith.addf %37, %40 : vector<16x128xf32>
    %c0_17 = arith.constant 0 : index
    %c0_18 = arith.constant 0 : index
    %42 = vector.load %arg6[%c0_17, %c0_18] : memref<16x128xf32, #tpu.memory_space<vmem>>, vector<16x128xf32>
    tpu.vector_store %arg6[%c0_17, %c0_18], %41 {strides = array<i32>} : memref<16x128xf32, #tpu.memory_space<vmem>>, vector<16x128xf32>,
    return
  }
  func.func @transform_0(%arg0: i32) -> (i32, i32) {
    %c0_i32 = arith.constant 0 : i32
    %c0_i32_0 = arith.constant 0 : i32
    return %arg0, %c0_i32 : i32, i32
  }
  func.func @transform_1(%arg0: i32) -> (i32, i32) {
    %c0_i32 = arith.constant 0 : i32
    %c0_i32_0 = arith.constant 0 : i32
    %c0_i32_1 = arith.constant 0 : i32
    return %c0_i32, %c0_i32_0 : i32, i32
  }
  func.func @transform_2(%arg0: i32) -> (i32, i32) {
    %c0_i32 = arith.constant 0 : i32
    %c0_i32_0 = arith.constant 0 : i32
    %c0_i32_1 = arith.constant 0 : i32
    return %c0_i32, %c0_i32_0 : i32, i32
  }
  func.func @transform_3(%arg0: i32) -> (i32, i32) {
    %c0_i32 = arith.constant 0 : i32
    %c0_i32_0 = arith.constant 0 : i32
    %c0_i32_1 = arith.constant 0 : i32
    return %c0_i32, %c0_i32_0 : i32, i32
  }
  func.func @transform_4(%arg0: i32) -> (i32, i32) {
    %c0_i32 = arith.constant 0 : i32
    %c0_i32_0 = arith.constant 0 : i32
    %c0_i32_1 = arith.constant 0 : i32
    return %c0_i32, %c0_i32_0 : i32, i32
  }
  func.func @transform_5(%arg0: i32) -> (i32, i32) {
    %c0_i32 = arith.constant 0 : i32
    %c0_i32_0 = arith.constant 0 : i32
    return %arg0, %c0_i32 : i32, i32
  }
}

</mosaic_0001>

<llo_original>
// kernel: embedding_forward.1
$region0: #{embedding_forward.1}
  #allocation0 [shape = 'u32[]', space=smem, size = 0x4, offset = 0x4, fixed_abs, tag = 'smem constant byte address 0x4 - core index']
  #allocation1 [shape = 'u32[144,128]{1,0:T(1,128)}', space=vmem, size = 0x12000, scoped, tag = 'internal scratch']
  %s0 = inlined_call_operand.vmem [shape: f32[16,128], index: 0, kind: input, shape index: {}]
  %s1 = inlined_call_operand.vmem [shape: f32[128,128], index: 1, kind: input, shape index: {}]
  %s2 = inlined_call_operand.vmem [shape: f32[128,256], index: 2, kind: input, shape index: {}]
  %s3 = inlined_call_operand.vmem [shape: f32[128,256], index: 3, kind: input, shape index: {}]
  %s4 = inlined_call_operand.vmem [shape: f32[2,256], index: 4, kind: input, shape index: {}]
  %s5 = inlined_call_operand.vmem [shape: f32[16,128], index: 5, kind: output, shape index: {}]
  %s6 = sld [smem:[#allocation0]]
  $region30: #{embedding_forward.1} parent=0
    _
  %s8 = ssub.s32 1, %s6
  %s9 = scalar_select 0, %s8, %s6
  // Predicated region
  $region2: #{embedding_forward.1} parent=0 // pred_check
    _
  $region3: #{embedding_forward.1} parent=0 // pred_check_branch
    %11 = sbr.rel (0) target = $region5
  $region4: #{embedding_forward.1} parent=0 // pred_region
    _
  $region5: #{embedding_forward.1} parent=0 // pred_fallthru
    _
  // Predicated region
  $region6: #{embedding_forward.1} parent=0 // pred_check
    _
  $region7: #{embedding_forward.1} parent=0 // pred_check_branch
    %13 = sbr.rel (0) target = $region9
  $region8: #{embedding_forward.1} parent=0 // pred_region
    _
  $region9: #{embedding_forward.1} parent=0 // pred_fallthru
    _
  // Predicated region
  $region10: #{embedding_forward.1} parent=0 // pred_check
    _
  $region11: #{embedding_forward.1} parent=0 // pred_check_branch
    %15 = sbr.rel (0) target = $region13
  $region12: #{embedding_forward.1} parent=0 // pred_region
    _
  $region13: #{embedding_forward.1} parent=0 // pred_fallthru
    _
  // Predicated region
  $region14: #{embedding_forward.1} parent=0 // pred_check
    _
  $region15: #{embedding_forward.1} parent=0 // pred_check_branch
    %17 = sbr.rel (0) target = $region17
  $region16: #{embedding_forward.1} parent=0 // pred_region
    _
  $region17: #{embedding_forward.1} parent=0 // pred_fallthru
    _
  // Predicated region
  $region18: #{embedding_forward.1} parent=0 // pred_check
    _
  $region19: #{embedding_forward.1} parent=0 // pred_check_branch
    %19 = sbr.rel (0) target = $region21
  $region20: #{embedding_forward.1} parent=0 // pred_region
    _
  $region21: #{embedding_forward.1} parent=0 // pred_fallthru
    _
  %v20 = vld [vmem:[%s0] sm:$0xff]
  %v21 = vld [vmem:[%s0 + $0x8] sm:$0xff]
  %v22 = vld [vmem:[%s1] sm:$0xff]
  %v23 = vld [vmem:[%s1 + $0x8] sm:$0xff]
  %v24 = vld [vmem:[%s1 + $0x10] sm:$0xff]
  %v25 = vld [vmem:[%s1 + $0x18] sm:$0xff]
  %v26 = vld [vmem:[%s1 + $0x20] sm:$0xff]
  %v27 = vld [vmem:[%s1 + $0x28] sm:$0xff]
  %v28 = vld [vmem:[%s1 + $0x30] sm:$0xff]
  %v29 = vld [vmem:[%s1 + $0x38] sm:$0xff]
  %v30 = vld [vmem:[%s1 + $0x40] sm:$0xff]
  %v31 = vld [vmem:[%s1 + $0x48] sm:$0xff]
  %v32 = vld [vmem:[%s1 + $0x50] sm:$0xff]
  %v33 = vld [vmem:[%s1 + $0x58] sm:$0xff]
  %v34 = vld [vmem:[%s1 + $0x60] sm:$0xff]
  %v35 = vld [vmem:[%s1 + $0x68] sm:$0xff]
  %v36 = vld [vmem:[%s1 + $0x70] sm:$0xff]
  %v37 = vld [vmem:[%s1 + $0x78] sm:$0xff]
  %38 = vmatprep.subr.mxu0 0.0
  %39 = vmatpush1.msra.mxu0 %v37
  %40 = vmatprep.subr.mxu0 0.0
  %41 = vmatpush1.msra.mxu0 %v36
  %42 = vmatprep.subr.mxu0 0.0
  %43 = vmatpush1.msra.mxu0 %v35
  %44 = vmatprep.subr.mxu0 0.0
  %45 = vmatpush1.msra.mxu0 %v34
  %46 = vmatprep.subr.mxu0 0.0
  %47 = vmatpush1.msra.mxu0 %v33
  %48 = vmatprep.subr.mxu0 0.0
  %49 = vmatpush1.msra.mxu0 %v32
  %50 = vmatprep.subr.mxu0 0.0
  %51 = vmatpush1.msra.mxu0 %v31
  %52 = vmatprep.subr.mxu0 0.0
  %53 = vmatpush1.msra.mxu0 %v30
  %54 = vmatprep.subr.mxu0 0.0
  %55 = vmatpush1.msra.mxu0 %v29
  %56 = vmatprep.subr.mxu0 0.0
  %57 = vmatpush1.msra.mxu0 %v28
  %58 = vmatprep.subr.mxu0 0.0
  %59 = vmatpush1.msra.mxu0 %v27
  %60 = vmatprep.subr.mxu0 0.0
  %61 = vmatpush1.msra.mxu0 %v26
  %62 = vmatprep.subr.mxu0 0.0
  %63 = vmatpush1.msra.mxu0 %v25
  %64 = vmatprep.subr.mxu0 0.0
  %65 = vmatpush1.msra.mxu0 %v24
  %66 = vmatprep.subr.mxu0 0.0
  %67 = vmatpush1.msra.mxu0 %v23
  %68 = vmatprep.subr.mxu0 0.0
  %69 = vmatpush1.msra.mxu0 %v22
  %70 = vmatprep.subr.mxu0 0.0
  %71 = vmatpush2.msra.mxu0 0.0
  %72 = vmatprep.subr.mxu0 0.0
  %73 = vmatpush2.msra.mxu0 0.0
  %74 = vmatprep.subr.mxu0 0.0
  %75 = vmatpush2.msra.mxu0 0.0
  %76 = vmatprep.subr.mxu0 0.0
  %77 = vmatpush2.msra.mxu0 0.0
  %78 = vmatprep.subr.mxu0 0.0
  %79 = vmatpush2.msra.mxu0 0.0
  %80 = vmatprep.subr.mxu0 0.0
  %81 = vmatpush2.msra.mxu0 0.0
  %82 = vmatprep.subr.mxu0 0.0
  %83 = vmatpush2.msra.mxu0 0.0
  %84 = vmatprep.subr.mxu0 0.0
  %85 = vmatpush2.msra.mxu0 0.0
  %86 = vmatprep.subr.mxu0 0.0
  %87 = vmatpush2.msra.mxu0 0.0
  %88 = vmatprep.subr.mxu0 0.0
  %89 = vmatpush2.msra.mxu0 0.0
  %90 = vmatprep.subr.mxu0 0.0
  %91 = vmatpush2.msra.mxu0 0.0
  %92 = vmatprep.subr.mxu0 0.0
  %93 = vmatpush2.msra.mxu0 0.0
  %94 = vmatprep.subr.mxu0 0.0
  %95 = vmatpush2.msra.mxu0 0.0
  %96 = vmatprep.subr.mxu0 0.0
  %97 = vmatpush2.msra.mxu0 0.0
  %98 = vmatprep.subr.mxu0 0.0
  %99 = vmatpush2.msra.mxu0 0.0
  %100 = vmatprep.subr.mxu0 0.0
  %101 = vmatpush2.msra.mxu0 0.0
  %102 = vmatprep.mubr.f32.mxu0 0.0
  %103 = vmatmul.mubr.f32.gmra.mxu0 %v20
  %v104 = vpop.f32.mrf.mxu0
  %v105 = vadd.f32 0.0, %v104
  %v106 = vpop.f32.mrf.mxu0
  %107 = vmatprep.mubr.f32.mxu0 0.0
  %108 = vmatmul.mubr.f32.gmra.mxu0 %v21
  %v109 = vpop.f32.mrf.mxu0
  %v110 = vadd.f32 0.0, %v109
  %v111 = vpop.f32.mrf.mxu0
  %112 = vdwg.mxu0
  %v113 = vld [vmem:[%s4] sm:$0xf]
  %v114 = vld [vmem:[%s2] sm:$0xff]
  %v115 = vld [vmem:[%s2 + $0x8] sm:$0xff]
  %v116 = vld [vmem:[%s2 + $0x10] sm:$0xff]
  %v117 = vld [vmem:[%s2 + $0x18] sm:$0xff]
  %v118 = vld [vmem:[%s2 + $0x20] sm:$0xff]
  %v119 = vld [vmem:[%s2 + $0x28] sm:$0xff]
  %v120 = vld [vmem:[%s2 + $0x30] sm:$0xff]
  %v121 = vld [vmem:[%s2 + $0x38] sm:$0xff]
  %v122 = vld [vmem:[%s2 + $0x40] sm:$0xff]
  %v123 = vld [vmem:[%s2 + $0x48] sm:$0xff]
  %v124 = vld [vmem:[%s2 + $0x50] sm:$0xff]
  %v125 = vld [vmem:[%s2 + $0x58] sm:$0xff]
  %v126 = vld [vmem:[%s2 + $0x60] sm:$0xff]
  %v127 = vld [vmem:[%s2 + $0x68] sm:$0xff]
  %v128 = vld [vmem:[%s2 + $0x70] sm:$0xff]
  %v129 = vld [vmem:[%s2 + $0x78] sm:$0xff]
  %v130 = vld [vmem:[%s2 + $0x80] sm:$0xff]
  %v131 = vld [vmem:[%s2 + $0x88] sm:$0xff]
  %v132 = vld [vmem:[%s2 + $0x90] sm:$0xff]
  %v133 = vld [vmem:[%s2 + $0x98] sm:$0xff]
  %v134 = vld [vmem:[%s2 + $0xa0] sm:$0xff]
  %v135 = vld [vmem:[%s2 + $0xa8] sm:$0xff]
  %v136 = vld [vmem:[%s2 + $0xb0] sm:$0xff]
  %v137 = vld [vmem:[%s2 + $0xb8] sm:$0xff]
  %v138 = vld [vmem:[%s2 + $0xc0] sm:$0xff]
  %v139 = vld [vmem:[%s2 + $0xc8] sm:$0xff]
  %v140 = vld [vmem:[%s2 + $0xd0] sm:$0xff]
  %v141 = vld [vmem:[%s2 + $0xd8] sm:$0xff]
  %v142 = vld [vmem:[%s2 + $0xe0] sm:$0xff]
  %v143 = vld [vmem:[%s2 + $0xe8] sm:$0xff]
  %v144 = vld [vmem:[%s2 + $0xf0] sm:$0xff]
  %v145 = vld [vmem:[%s2 + $0xf8] sm:$0xff]
  %v147 = vlaneseq
  %v148 = vshrl.u32 %v147, 7
  %v149 = vsub.s32 0, %v148
  %v150 = vrot.slane %v113, %v149
  %v151 = vlaneseq
  %v152 = vshrl.u32 %v151, 7
  %v153 = vsub.s32 2, %v152
  %v154 = vrot.slane %v113, %v153
  %v157 = vlaneseq
  %v158 = vshrl.u32 %v157, 7
  %v159 = vsub.s32 0, %v158
  %v160 = vrot.slane %v150, %v159
  %v161 = vlaneseq
  %v162 = vshrl.u32 %v161, 7
  %v163 = vsub.s32 0, %v162
  %v164 = vrot.slane %v154, %v163
  %165 = vmatprep.subr.mxu0 %v145
  %166 = vmatpush1.msra.mxu0 %v144
  %167 = vmatprep.subr.mxu0 %v143
  %168 = vmatpush1.msra.mxu0 %v142
  %169 = vmatprep.subr.mxu0 %v141
  %170 = vmatpush1.msra.mxu0 %v140
  %171 = vmatprep.subr.mxu0 %v139
  %172 = vmatpush1.msra.mxu0 %v138
  %173 = vmatprep.subr.mxu0 %v137
  %174 = vmatpush1.msra.mxu0 %v136
  %175 = vmatprep.subr.mxu0 %v135
  %176 = vmatpush1.msra.mxu0 %v134
  %177 = vmatprep.subr.mxu0 %v133
  %178 = vmatpush1.msra.mxu0 %v132
  %179 = vmatprep.subr.mxu0 %v131
  %180 = vmatpush1.msra.mxu0 %v130
  %181 = vmatprep.subr.mxu0 %v129
  %182 = vmatpush1.msra.mxu0 %v128
  %183 = vmatprep.subr.mxu0 %v127
  %184 = vmatpush1.msra.mxu0 %v126
  %185 = vmatprep.subr.mxu0 %v125
  %186 = vmatpush1.msra.mxu0 %v124
  %187 = vmatprep.subr.mxu0 %v123
  %188 = vmatpush1.msra.mxu0 %v122
  %189 = vmatprep.subr.mxu0 %v121
  %190 = vmatpush1.msra.mxu0 %v120
  %191 = vmatprep.subr.mxu0 %v119
  %192 = vmatpush1.msra.mxu0 %v118
  %193 = vmatprep.subr.mxu0 %v117
  %194 = vmatpush1.msra.mxu0 %v116
  %195 = vmatprep.subr.mxu0 %v115
  %196 = vmatpush1.msra.mxu0 %v114
  %197 = vmatprep.subr.mxu0 0.0
  %198 = vmatpush2.msra.mxu0 0.0
  %199 = vmatprep.subr.mxu0 0.0
  %200 = vmatpush2.msra.mxu0 0.0
  %201 = vmatprep.subr.mxu0 0.0
  %202 = vmatpush2.msra.mxu0 0.0
  %203 = vmatprep.subr.mxu0 0.0
  %204 = vmatpush2.msra.mxu0 0.0
  %205 = vmatprep.subr.mxu0 0.0
  %206 = vmatpush2.msra.mxu0 0.0
  %207 = vmatprep.subr.mxu0 0.0
  %208 = vmatpush2.msra.mxu0 0.0
  %209 = vmatprep.subr.mxu0 0.0
  %210 = vmatpush2.msra.mxu0 0.0
  %211 = vmatprep.subr.mxu0 0.0
  %212 = vmatpush2.msra.mxu0 0.0
  %213 = vmatprep.subr.mxu0 0.0
  %214 = vmatpush2.msra.mxu0 0.0
  %215 = vmatprep.subr.mxu0 0.0
  %216 = vmatpush2.msra.mxu0 0.0
  %217 = vmatprep.subr.mxu0 0.0
  %218 = vmatpush2.msra.mxu0 0.0
  %219 = vmatprep.subr.mxu0 0.0
  %220 = vmatpush2.msra.mxu0 0.0
  %221 = vmatprep.subr.mxu0 0.0
  %222 = vmatpush2.msra.mxu0 0.0
  %223 = vmatprep.subr.mxu0 0.0
  %224 = vmatpush2.msra.mxu0 0.0
  %225 = vmatprep.subr.mxu0 0.0
  %226 = vmatpush2.msra.mxu0 0.0
  %227 = vmatprep.subr.mxu0 0.0
  %228 = vmatpush2.msra.mxu0 0.0
  %229 = vmatprep.mubr.f32.mxu0 0.0
  %230 = vmatmul.mubr.f32.gmra.mxu0 %v105
  %v231 = vpop.f32.mrf.mxu0
  %v232 = vadd.f32 %v160, %v231
  %v233 = vpop.f32.mrf.mxu0
  %v234 = vadd.f32 %v164, %v233
  %235 = vmatprep.mubr.f32.mxu0 0.0
  %236 = vmatmul.mubr.f32.gmra.mxu0 %v110
  %v237 = vpop.f32.mrf.mxu0
  %v238 = vadd.f32 %v160, %v237
  %v239 = vpop.f32.mrf.mxu0
  %v240 = vadd.f32 %v164, %v239
  %241 = vdwg.mxu0
  %v242 = vmax.f32 %v232, 0.0
  %v243 = vmax.f32 %v238, 0.0
  %v244 = vxor.u32 %v234, 2147483648
  %v245 = vxor.u32 %v240, 2147483648
  %v246 = vmul.f32 %v244, 1.442695
  %v247 = vpow.pop %v246
  %v248 = vmul.f32 %v245, 1.442695
  %v249 = vpow.pop %v248
  %v250 = vadd.f32 %v247, 1.0
  %v251 = vadd.f32 %v249, 1.0
  %v252 = vrcp.pop %v250
  %v253 = vmul.f32 1.0, %v252
  %v254 = vrcp.pop %v251
  %v255 = vmul.f32 1.0, %v254
  %v256 = vmul.f32 %v253, %v242
  %v257 = vmul.f32 %v255, %v243
  %v258 = vsub.f32 1.0, %v253
  %v259 = vsub.f32 1.0, %v255
  %v260 = vmul.f32 %v258, %v105
  %v261 = vmul.f32 %v259, %v110
  %v262 = vadd.f32 %v256, %v260
  %v263 = vadd.f32 %v257, %v261
  %v264 = vld [vmem:[%s3] sm:$0xff]
  %v265 = vld [vmem:[%s3 + $0x8] sm:$0xff]
  %v266 = vld [vmem:[%s3 + $0x10] sm:$0xff]
  %v267 = vld [vmem:[%s3 + $0x18] sm:$0xff]
  %v268 = vld [vmem:[%s3 + $0x20] sm:$0xff]
  %v269 = vld [vmem:[%s3 + $0x28] sm:$0xff]
  %v270 = vld [vmem:[%s3 + $0x30] sm:$0xff]
  %v271 = vld [vmem:[%s3 + $0x38] sm:$0xff]
  %v272 = vld [vmem:[%s3 + $0x40] sm:$0xff]
  %v273 = vld [vmem:[%s3 + $0x48] sm:$0xff]
  %v274 = vld [vmem:[%s3 + $0x50] sm:$0xff]
  %v275 = vld [vmem:[%s3 + $0x58] sm:$0xff]
  %v276 = vld [vmem:[%s3 + $0x60] sm:$0xff]
  %v277 = vld [vmem:[%s3 + $0x68] sm:$0xff]
  %v278 = vld [vmem:[%s3 + $0x70] sm:$0xff]
  %v279 = vld [vmem:[%s3 + $0x78] sm:$0xff]
  %v280 = vld [vmem:[%s3 + $0x80] sm:$0xff]
  %v281 = vld [vmem:[%s3 + $0x88] sm:$0xff]
  %v282 = vld [vmem:[%s3 + $0x90] sm:$0xff]
  %v283 = vld [vmem:[%s3 + $0x98] sm:$0xff]
  %v284 = vld [vmem:[%s3 + $0xa0] sm:$0xff]
  %v285 = vld [vmem:[%s3 + $0xa8] sm:$0xff]
  %v286 = vld [vmem:[%s3 + $0xb0] sm:$0xff]
  %v287 = vld [vmem:[%s3 + $0xb8] sm:$0xff]
  %v288 = vld [vmem:[%s3 + $0xc0] sm:$0xff]
  %v289 = vld [vmem:[%s3 + $0xc8] sm:$0xff]
  %v290 = vld [vmem:[%s3 + $0xd0] sm:$0xff]
  %v291 = vld [vmem:[%s3 + $0xd8] sm:$0xff]
  %v292 = vld [vmem:[%s3 + $0xe0] sm:$0xff]
  %v293 = vld [vmem:[%s3 + $0xe8] sm:$0xff]
  %v294 = vld [vmem:[%s3 + $0xf0] sm:$0xff]
  %v295 = vld [vmem:[%s3 + $0xf8] sm:$0xff]
  %v296 = vlaneseq
  %v297 = vshrl.u32 %v296, 7
  %v298 = vsub.s32 1, %v297
  %v299 = vrot.slane %v113, %v298
  %v300 = vlaneseq
  %v301 = vshrl.u32 %v300, 7
  %v302 = vsub.s32 3, %v301
  %v303 = vrot.slane %v113, %v302
  %v306 = vlaneseq
  %v307 = vshrl.u32 %v306, 7
  %v308 = vsub.s32 1, %v307
  %v309 = vrot.slane %v299, %v308
  %v310 = vlaneseq
  %v311 = vshrl.u32 %v310, 7
  %v312 = vsub.s32 1, %v311
  %v313 = vrot.slane %v303, %v312
  %314 = vmatprep.subr.mxu0 %v295
  %315 = vmatpush1.msra.mxu0 %v294
  %316 = vmatprep.subr.mxu0 %v293
  %317 = vmatpush1.msra.mxu0 %v292
  %318 = vmatprep.subr.mxu0 %v291
  %319 = vmatpush1.msra.mxu0 %v290
  %320 = vmatprep.subr.mxu0 %v289
  %321 = vmatpush1.msra.mxu0 %v288
  %322 = vmatprep.subr.mxu0 %v287
  %323 = vmatpush1.msra.mxu0 %v286
  %324 = vmatprep.subr.mxu0 %v285
  %325 = vmatpush1.msra.mxu0 %v284
  %326 = vmatprep.subr.mxu0 %v283
  %327 = vmatpush1.msra.mxu0 %v282
  %328 = vmatprep.subr.mxu0 %v281
  %329 = vmatpush1.msra.mxu0 %v280
  %330 = vmatprep.subr.mxu0 %v279
  %331 = vmatpush1.msra.mxu0 %v278
  %332 = vmatprep.subr.mxu0 %v277
  %333 = vmatpush1.msra.mxu0 %v276
  %334 = vmatprep.subr.mxu0 %v275
  %335 = vmatpush1.msra.mxu0 %v274
  %336 = vmatprep.subr.mxu0 %v273
  %337 = vmatpush1.msra.mxu0 %v272
  %338 = vmatprep.subr.mxu0 %v271
  %339 = vmatpush1.msra.mxu0 %v270
  %340 = vmatprep.subr.mxu0 %v269
  %341 = vmatpush1.msra.mxu0 %v268
  %342 = vmatprep.subr.mxu0 %v267
  %343 = vmatpush1.msra.mxu0 %v266
  %344 = vmatprep.subr.mxu0 %v265
  %345 = vmatpush1.msra.mxu0 %v264
  %346 = vmatprep.subr.mxu0 0.0
  %347 = vmatpush2.msra.mxu0 0.0
  %348 = vmatprep.subr.mxu0 0.0
  %349 = vmatpush2.msra.mxu0 0.0
  %350 = vmatprep.subr.mxu0 0.0
  %351 = vmatpush2.msra.mxu0 0.0
  %352 = vmatprep.subr.mxu0 0.0
  %353 = vmatpush2.msra.mxu0 0.0
  %354 = vmatprep.subr.mxu0 0.0
  %355 = vmatpush2.msra.mxu0 0.0
  %356 = vmatprep.subr.mxu0 0.0
  %357 = vmatpush2.msra.mxu0 0.0
  %358 = vmatprep.subr.mxu0 0.0
  %359 = vmatpush2.msra.mxu0 0.0
  %360 = vmatprep.subr.mxu0 0.0
  %361 = vmatpush2.msra.mxu0 0.0
  %362 = vmatprep.subr.mxu0 0.0
  %363 = vmatpush2.msra.mxu0 0.0
  %364 = vmatprep.subr.mxu0 0.0
  %365 = vmatpush2.msra.mxu0 0.0
  %366 = vmatprep.subr.mxu0 0.0
  %367 = vmatpush2.msra.mxu0 0.0
  %368 = vmatprep.subr.mxu0 0.0
  %369 = vmatpush2.msra.mxu0 0.0
  %370 = vmatprep.subr.mxu0 0.0
  %371 = vmatpush2.msra.mxu0 0.0
  %372 = vmatprep.subr.mxu0 0.0
  %373 = vmatpush2.msra.mxu0 0.0
  %374 = vmatprep.subr.mxu0 0.0
  %375 = vmatpush2.msra.mxu0 0.0
  %376 = vmatprep.subr.mxu0 0.0
  %377 = vmatpush2.msra.mxu0 0.0
  %378 = vmatprep.mubr.f32.mxu0 0.0
  %379 = vmatmul.mubr.f32.gmra.mxu0 %v262
  %v380 = vpop.f32.mrf.mxu0
  %v381 = vadd.f32 %v309, %v380
  %v382 = vpop.f32.mrf.mxu0
  %v383 = vadd.f32 %v313, %v382
  %384 = vmatprep.mubr.f32.mxu0 0.0
  %385 = vmatmul.mubr.f32.gmra.mxu0 %v263
  %v386 = vpop.f32.mrf.mxu0
  %v387 = vadd.f32 %v309, %v386
  %v388 = vpop.f32.mrf.mxu0
  %v389 = vadd.f32 %v313, %v388
  %390 = vdwg.mxu0
  %v391 = vmax.f32 %v381, 0.0
  %v392 = vmax.f32 %v387, 0.0
  %v393 = vxor.u32 %v383, 2147483648
  %v394 = vxor.u32 %v389, 2147483648
  %v395 = vmul.f32 %v393, 1.442695
  %v396 = vpow.pop %v395
  %v397 = vmul.f32 %v394, 1.442695
  %v398 = vpow.pop %v397
  %v399 = vadd.f32 %v396, 1.0
  %v400 = vadd.f32 %v398, 1.0
  %v401 = vrcp.pop %v399
  %v402 = vmul.f32 1.0, %v401
  %v403 = vrcp.pop %v400
  %v404 = vmul.f32 1.0, %v403
  %v405 = vmul.f32 %v402, %v391
  %v406 = vmul.f32 %v404, %v392
  %v407 = vsub.f32 1.0, %v402
  %v408 = vsub.f32 1.0, %v404
  %v409 = vmul.f32 %v407, %v262
  %v410 = vmul.f32 %v408, %v263
  %v411 = vadd.f32 %v405, %v409
  %v412 = vadd.f32 %v406, %v410
  %413 = vst [vmem:[%s5] sm:$0xff] %v411
  %414 = vst [vmem:[%s5 + $0x8] sm:$0xff] %v412
  // Predicated region
  $region22: #{embedding_forward.1} parent=0 // pred_check
    _
  $region23: #{embedding_forward.1} parent=0 // pred_check_branch
    %416 = sbr.rel (0) target = $region25
  $region24: #{embedding_forward.1} parent=0 // pred_region
    _
  $region25: #{embedding_forward.1} parent=0 // pred_fallthru
    _
  // Predicated region
  $region26: #{embedding_forward.1} parent=0 // pred_check
    _
  $region27: #{embedding_forward.1} parent=0 // pred_check_branch
    %418 = sbr.rel (0) target = $region29
  $region28: #{embedding_forward.1} parent=0 // pred_region
    _
  $region29: #{embedding_forward.1} parent=0 // pred_fallthru
    _

</llo_original>
